<compile_context>
chip_gen: v7x
topology: tpu7x:2x2x1
jax: 0.10.0
libtpu: 0.0.40
codegen_flags: <defaults>
</compile_context>

<pallas_src>
import jax
import jax.numpy as jnp
from jax.experimental import pallas as pl
from jax.experimental.pallas import tpu as pltpu

# Hopper-v2 dimensions (synthetic, no gym dependency)
N_OBSERVATIONS = 11
N_ACTIONS = 3
HIDDEN = 256
ACTION_RANGE = 1.0


def _round_up(a, m):
    return ((a + m - 1) // m) * m


def actor_mlp_kernel(x_ref, w1_ref, b1_ref, w2_ref, b2_ref, w3_ref, b3_ref,
                     ar_ref, out_ref):
    # ar_ref lives in SMEM: scalar read on the scalar path.
    action_range = ar_ref[0, 0]
    cdt = w1_ref.dtype  # MXU input dtype (bf16 or f32); accumulation is always f32.

    # Layer 1: Linear(n_obs, 256) + ReLU   (bias/ReLU in f32)
    x = x_ref[...].astype(cdt)
    h1 = jnp.dot(x, w1_ref[...], preferred_element_type=jnp.float32) + b1_ref[...]
    h1 = jnp.maximum(h1, 0.0)

    # Layer 2: Linear(256, 256) + ReLU
    h2 = jnp.dot(h1.astype(cdt), w2_ref[...],
                 preferred_element_type=jnp.float32) + b2_ref[...]
    h2 = jnp.maximum(h2, 0.0)

    # Output: Linear(256, n_actions) -> tanh -> * action_range
    y = jnp.dot(h2.astype(cdt), w3_ref[...],
                preferred_element_type=jnp.float32) + b3_ref[...]
    y = jnp.tanh(y)
    out_ref[...] = (y * action_range).astype(out_ref.dtype)


def actor_forward(x, params, action_range=ACTION_RANGE, *,
                  block_b=1024, compute_dtype=jnp.bfloat16):
    """Fused actor MLP. x: (..., n_observations) -> (B, n_actions) float32."""
    x = x.reshape(-1, N_OBSERVATIONS).astype(jnp.float32)  # matches x.view(-1, n_obs)
    B = x.shape[0]

    w1, b1, w2, b2, w3, b3 = params
    cdt = jnp.dtype(compute_dtype)
    w1 = w1.astype(cdt)
    w2 = w2.astype(cdt)
    w3 = w3.astype(cdt)
    b1 = b1.astype(jnp.float32)
    b2 = b2.astype(jnp.float32)
    b3 = b3.astype(jnp.float32)

    # Batch tiling: TB multiple of 8 (sublane), pad B up to a multiple of TB.
    tb = min(block_b, _round_up(max(B, 1), 8))
    b_pad = _round_up(B, tb)
    if b_pad != B:
        x = jnp.pad(x, ((0, b_pad - B), (0, 0)))
    grid = (b_pad // tb,)

    ar = jnp.full((1, 1), action_range, dtype=jnp.float32)

    flops = 2 * b_pad * (N_OBSERVATIONS * HIDDEN + HIDDEN * HIDDEN + HIDDEN * N_ACTIONS)
    bytes_accessed = (
        b_pad * N_OBSERVATIONS * 4 + b_pad * N_ACTIONS * 4
        + sum(int(a.size) * a.dtype.itemsize for a in (w1, b1, w2, b2, w3, b3))
    )
    cost = pl.CostEstimate(flops=flops,
                           transcendentals=b_pad * N_ACTIONS,
                           bytes_accessed=bytes_accessed)

    out = pl.pallas_call(
        actor_mlp_kernel,
        out_shape=jax.ShapeDtypeStruct((b_pad, N_ACTIONS), jnp.float32),
        grid=grid,
        in_specs=[
            pl.BlockSpec((tb, N_OBSERVATIONS), lambda i: (i, 0)),   # x tile
            pl.BlockSpec((N_OBSERVATIONS, HIDDEN), lambda i: (0, 0)),  # w1 (resident)
            pl.BlockSpec((1, HIDDEN), lambda i: (0, 0)),               # b1
            pl.BlockSpec((HIDDEN, HIDDEN), lambda i: (0, 0)),          # w2
            pl.BlockSpec((1, HIDDEN), lambda i: (0, 0)),               # b2
            pl.BlockSpec((HIDDEN, N_ACTIONS), lambda i: (0, 0)),       # w3
            pl.BlockSpec((1, N_ACTIONS), lambda i: (0, 0)),            # b3
            pl.BlockSpec(memory_space=pltpu.SMEM),                     # action_range scalar
        ],
        out_specs=pl.BlockSpec((tb, N_ACTIONS), lambda i: (i, 0)),
        compiler_params=pltpu.CompilerParams(
            dimension_semantics=("parallel",)),
        cost_estimate=cost,
    )(x, w1, b1, w2, b2, w3, b3, ar)

    return out[:B] if b_pad != B else out


def init_params(key):
    """Deterministic PyTorch-style (uniform +-1/sqrt(fan_in)) init, weights pre-transposed
    to (in_features, out_features) so the kernel computes y = x @ W + b."""
    def linear(k, fan_in, fan_out):
        kw, kb = jax.random.split(k)
        bound = 1.0 / jnp.sqrt(fan_in)
        w = jax.random.uniform(kw, (fan_in, fan_out), jnp.float32, -bound, bound)
        b = jax.random.uniform(kb, (1, fan_out), jnp.float32, -bound, bound)
        return w, b

    k1, k2, k3 = jax.random.split(key, 3)
    w1, b1 = linear(k1, N_OBSERVATIONS, HIDDEN)
    w2, b2 = linear(k2, HIDDEN, HIDDEN)
    w3, b3 = linear(k3, HIDDEN, N_ACTIONS)
    return (w1, b1, w2, b2, w3, b3)


def reference_forward(x, params, action_range=ACTION_RANGE):
    x = x.reshape(-1, N_OBSERVATIONS)
    w1, b1, w2, b2, w3, b3 = params
    h = jnp.maximum(x @ w1 + b1, 0.0)
    h = jnp.maximum(h @ w2 + b2, 0.0)
    return jnp.tanh(h @ w3 + b3) * action_range


if __name__ == "__main__":
    key = jax.random.PRNGKey(0)
    k_params, k_x1, k_x2 = jax.random.split(key, 3)
    params = init_params(k_params)

    # 1) Small batch, pure f32 compute: tight check against the JAX reference.
    x_small = jax.random.normal(k_x1, (8, N_OBSERVATIONS), dtype=jnp.float32)
    out_f32 = jax.block_until_ready(
        actor_forward(x_small, params, compute_dtype=jnp.float32))
    ref_small = reference_forward(x_small, params)
    assert out_f32.shape == (8, N_ACTIONS)
    assert jnp.allclose(out_f32, ref_small, atol=1e-5, rtol=1e-5), "f32 mismatch vs reference"

    # 2) Batch not a multiple of the tile, bf16 MXU inputs + f32 accumulation
    #    (exercises the batch grid, weight residency and tail padding).
    x_big = jax.random.normal(k_x2, (300, N_OBSERVATIONS), dtype=jnp.float32)
    out_bf16 = jax.block_until_ready(
        actor_forward(x_big, params, block_b=128, compute_dtype=jnp.bfloat16))
    ref_big = reference_forward(x_big, params)
    assert out_bf16.shape == (300, N_ACTIONS)
    assert jnp.allclose(out_bf16, ref_big, atol=5e-2, rtol=5e-2), "bf16 mismatch vs reference"

    print("KERNEL_OK")
</pallas_src>

<mosaic_0001>
module attributes {stable_mosaic.version = 11 : i64} {
  func.func @actor_mlp_kernel(%arg0: i32, %arg1: memref<8x11xf32, #tpu.memory_space<vmem>>, %arg2: memref<11x256xf32, #tpu.memory_space<vmem>>, %arg3: memref<1x256xf32, #tpu.memory_space<vmem>>, %arg4: memref<256x256xf32, #tpu.memory_space<vmem>>, %arg5: memref<1x256xf32, #tpu.memory_space<vmem>>, %arg6: memref<256x3xf32, #tpu.memory_space<vmem>>, %arg7: memref<1x3xf32, #tpu.memory_space<vmem>>, %arg8: memref<1x1xf32, #tpu.memory_space<smem>>, %arg9: memref<8x3xf32, #tpu.memory_space<vmem>>) attributes {dimension_semantics = [#tpu.dimension_semantics<parallel>], iteration_bounds = array<i64: 1>, scalar_prefetch = 0 : i64, scratch_operands = 0 : i64, tpu.core_type = #tpu.core_type<tc>, window_params = [{transform_indices = @transform_0, window_bounds = array<i64: 8, 11>}, {pipeline_mode = #tpu.pipeline_mode<synchronous>, transform_indices = @transform_1, window_bounds = array<i64: 11, 256>}, {pipeline_mode = #tpu.pipeline_mode<synchronous>, transform_indices = @transform_2, window_bounds = array<i64: 1, 256>}, {pipeline_mode = #tpu.pipeline_mode<synchronous>, transform_indices = @transform_3, window_bounds = array<i64: 256, 256>}, {pipeline_mode = #tpu.pipeline_mode<synchronous>, transform_indices = @transform_4, window_bounds = array<i64: 1, 256>}, {pipeline_mode = #tpu.pipeline_mode<synchronous>, transform_indices = @transform_5, window_bounds = array<i64: 256, 3>}, {pipeline_mode = #tpu.pipeline_mode<synchronous>, transform_indices = @transform_6, window_bounds = array<i64: 1, 3>}, {transform_indices = @transform_7, window_bounds = array<i64: 1, 1>}, {transform_indices = @transform_8, window_bounds = array<i64: 8, 3>}]} {
    %c0 = arith.constant 0 : index
    %c0_0 = arith.constant 0 : index
    %0 = memref.load %arg8[%c0, %c0_0] : memref<1x1xf32, #tpu.memory_space<smem>>
    %c0_1 = arith.constant 0 : index
    %c0_2 = arith.constant 0 : index
    %1 = vector.load %arg1[%c0_1, %c0_2] : memref<8x11xf32, #tpu.memory_space<vmem>>, vector<8x11xf32>
    %c0_3 = arith.constant 0 : index
    %c0_4 = arith.constant 0 : index
    %2 = vector.load %arg2[%c0_3, %c0_4] : memref<11x256xf32, #tpu.memory_space<vmem>>, vector<11x256xf32>
    %cst = arith.constant dense<0.000000e+00> : vector<8x256xf32>
    %3 = tpu.matmul %1, %2, %cst {dimension_numbers = #tpu.dot_dimension_numbers<[1], [0], [0], [1], [0, 0, 1, 1], [], []>} : vector<8x11xf32>, vector<11x256xf32>, vector<8x256xf32> -> vector<8x256xf32>
    %c0_5 = arith.constant 0 : index
    %c0_6 = arith.constant 0 : index
    %4 = vector.load %arg3[%c0_5, %c0_6] : memref<1x256xf32, #tpu.memory_space<vmem>>, vector<1x256xf32>
    %5 = vector.broadcast %4 : vector<1x256xf32> to vector<8x256xf32>
    %6 = arith.addf %3, %5 : vector<8x256xf32>
    %cst_7 = arith.constant 0.000000e+00 : f32
    %7 = vector.broadcast %cst_7 : f32 to vector<8x256xf32>
    %8 = arith.maximumf %6, %7 : vector<8x256xf32>
    %c0_8 = arith.constant 0 : index
    %c0_9 = arith.constant 0 : index
    %9 = vector.load %arg4[%c0_8, %c0_9] : memref<256x256xf32, #tpu.memory_space<vmem>>, vector<256x256xf32>
    %cst_10 = arith.constant dense<0.000000e+00> : vector<8x256xf32>
    %10 = tpu.matmul %8, %9, %cst_10 {dimension_numbers = #tpu.dot_dimension_numbers<[1], [0], [0], [1], [0, 0, 1, 1], [], []>} : vector<8x256xf32>, vector<256x256xf32>, vector<8x256xf32> -> vector<8x256xf32>
    %c0_11 = arith.constant 0 : index
    %c0_12 = arith.constant 0 : index
    %11 = vector.load %arg5[%c0_11, %c0_12] : memref<1x256xf32, #tpu.memory_space<vmem>>, vector<1x256xf32>
    %12 = vector.broadcast %11 : vector<1x256xf32> to vector<8x256xf32>
    %13 = arith.addf %10, %12 : vector<8x256xf32>
    %cst_13 = arith.constant 0.000000e+00 : f32
    %14 = vector.broadcast %cst_13 : f32 to vector<8x256xf32>
    %15 = arith.maximumf %13, %14 : vector<8x256xf32>
    %c0_14 = arith.constant 0 : index
    %c0_15 = arith.constant 0 : index
    %16 = vector.load %arg6[%c0_14, %c0_15] : memref<256x3xf32, #tpu.memory_space<vmem>>, vector<256x3xf32>
    %cst_16 = arith.constant dense<0.000000e+00> : vector<8x3xf32>
    %17 = tpu.matmul %15, %16, %cst_16 {dimension_numbers = #tpu.dot_dimension_numbers<[1], [0], [0], [1], [0, 0, 1, 1], [], []>} : vector<8x256xf32>, vector<256x3xf32>, vector<8x3xf32> -> vector<8x3xf32>
    %c0_17 = arith.constant 0 : index
    %c0_18 = arith.constant 0 : index
    %18 = vector.load %arg7[%c0_17, %c0_18] : memref<1x3xf32, #tpu.memory_space<vmem>>, vector<1x3xf32>
    %19 = vector.broadcast %18 : vector<1x3xf32> to vector<8x3xf32>
    %20 = arith.addf %17, %19 : vector<8x3xf32>
    %21 = math.tanh %20 : vector<8x3xf32>
    %22 = vector.broadcast %0 : f32 to vector<8x3xf32>
    %23 = arith.mulf %21, %22 : vector<8x3xf32>
    %c0_19 = arith.constant 0 : index
    %c0_20 = arith.constant 0 : index
    %24 = vector.load %arg9[%c0_19, %c0_20] : memref<8x3xf32, #tpu.memory_space<vmem>>, vector<8x3xf32>
    tpu.vector_store %arg9[%c0_19, %c0_20], %23 {strides = array<i32>} : memref<8x3xf32, #tpu.memory_space<vmem>>, vector<8x3xf32>,
    return
  }
  func.func @transform_0(%arg0: i32) -> (i32, i32) {
    %c0_i32 = arith.constant 0 : i32
    %c0_i32_0 = arith.constant 0 : i32
    return %arg0, %c0_i32 : i32, i32
  }
  func.func @transform_1(%arg0: i32) -> (i32, i32) {
    %c0_i32 = arith.constant 0 : i32
    %c0_i32_0 = arith.constant 0 : i32
    %c0_i32_1 = arith.constant 0 : i32
    return %c0_i32, %c0_i32_0 : i32, i32
  }
  func.func @transform_2(%arg0: i32) -> (i32, i32) {
    %c0_i32 = arith.constant 0 : i32
    %c0_i32_0 = arith.constant 0 : i32
    %c0_i32_1 = arith.constant 0 : i32
    return %c0_i32, %c0_i32_0 : i32, i32
  }
  func.func @transform_3(%arg0: i32) -> (i32, i32) {
    %c0_i32 = arith.constant 0 : i32
    %c0_i32_0 = arith.constant 0 : i32
    %c0_i32_1 = arith.constant 0 : i32
    return %c0_i32, %c0_i32_0 : i32, i32
  }
  func.func @transform_4(%arg0: i32) -> (i32, i32) {
    %c0_i32 = arith.constant 0 : i32
    %c0_i32_0 = arith.constant 0 : i32
    %c0_i32_1 = arith.constant 0 : i32
    return %c0_i32, %c0_i32_0 : i32, i32
  }
  func.func @transform_5(%arg0: i32) -> (i32, i32) {
    %c0_i32 = arith.constant 0 : i32
    %c0_i32_0 = arith.constant 0 : i32
    %c0_i32_1 = arith.constant 0 : i32
    return %c0_i32, %c0_i32_0 : i32, i32
  }
  func.func @transform_6(%arg0: i32) -> (i32, i32) {
    %c0_i32 = arith.constant 0 : i32
    %c0_i32_0 = arith.constant 0 : i32
    %c0_i32_1 = arith.constant 0 : i32
    return %c0_i32, %c0_i32_0 : i32, i32
  }
  func.func @transform_7(%arg0: i32) -> (i32, i32) {
    %c0_i32 = arith.constant 0 : i32
    %c0_i32_0 = arith.constant 0 : i32
    %c0_i32_1 = arith.constant 0 : i32
    return %c0_i32, %c0_i32_0 : i32, i32
  }
  func.func @transform_8(%arg0: i32) -> (i32, i32) {
    %c0_i32 = arith.constant 0 : i32
    %c0_i32_0 = arith.constant 0 : i32
    return %arg0, %c0_i32 : i32, i32
  }
}

</mosaic_0001>

<llo_original>
// kernel: tpu_custom_call.1
$region0: #{tpu_custom_call.1}
  #allocation0 [shape = 'u32[]', space=smem, size = 0x4, offset = 0x4, fixed_abs, tag = 'smem constant byte address 0x4 - core index']
  #allocation1 [shape = 'u32[144,128]{1,0:T(1,128)}', space=vmem, size = 0x12000, scoped, tag = 'internal scratch']
  #allocation2 [shape = 'f32[1,1]{1,0:T(1,128)S(6)}', space=smem, size = 0x200, scoped, tag = 'scoped memory for tpu_custom_call.1']
  %s0 = inlined_call_operand.vmem [shape: f32[8,11], index: 0, kind: input, shape index: {}]
  %s1 = inlined_call_operand.vmem [shape: f32[11,256], index: 1, kind: input, shape index: {}]
  %s2 = inlined_call_operand.vmem [shape: f32[1,256], index: 2, kind: input, shape index: {}]
  %s3 = inlined_call_operand.hbm [shape: f32[256,256], index: 3, kind: input, shape index: {}]
  %s4 = inlined_call_operand.vmem [shape: f32[1,256], index: 4, kind: input, shape index: {}]
  %s5 = inlined_call_operand.vmem [shape: f32[256,3], index: 5, kind: input, shape index: {}]
  %s6 = inlined_call_operand.vmem [shape: f32[1,3], index: 6, kind: input, shape index: {}]
  %s7 = inlined_call_operand.<no memory space> [shape: f32[1,1], index: 7, kind: input, shape index: {}]
  %s8 = inlined_call_operand.vmem [shape: f32[8,3], index: 8, kind: output, shape index: {}]
  %s9 = sld [smem:[#allocation0]]
  $region46: #{tpu_custom_call.1} parent=0
    _
  %s11 = ssub.s32 1, %s9
  %s12 = scalar_select 0, %s11, %s9
  %13 = sst [smem:[#allocation2]] %s7
  $region1: #{tpu_custom_call.1} parent=0
    #allocation3 [shape = 'u8[262144]{0}', space=vmem, size = 0x40000, scoped, tag = 'input window, operand 3, single buffered']
    #allocation4 [shape = 's32[1]{0}', space=sflag, size = 0x4, scoped, tag = 'scoped memory for tpu_custom_call.1']
    %14 = vsyncpa [#allocation4], 0
    // Predicated region
    $region2: #{tpu_custom_call.1} parent=1 // pred_check
      _
    $region3: #{tpu_custom_call.1} parent=1 // pred_check_branch
      %16 = sbr.rel (0) target = $region5
    $region4: #{tpu_custom_call.1} parent=1 // pred_region
      _
    $region5: #{tpu_custom_call.1} parent=1 // pred_fallthru
      _
    // Predicated region
    $region6: #{tpu_custom_call.1} parent=1 // pred_check
      _
    $region7: #{tpu_custom_call.1} parent=1 // pred_check_branch
      %18 = sbr.rel (0) target = $region9
    $region8: #{tpu_custom_call.1} parent=1 // pred_region
      _
    $region9: #{tpu_custom_call.1} parent=1 // pred_fallthru
      _
    // Predicated region
    $region10: #{tpu_custom_call.1} parent=1 // pred_check
      _
    $region11: #{tpu_custom_call.1} parent=1 // pred_check_branch
      %20 = sbr.rel (0) target = $region13
    $region12: #{tpu_custom_call.1} parent=1 // pred_region
      _
    $region13: #{tpu_custom_call.1} parent=1 // pred_fallthru
      _
    // Predicated region
    $region14: #{tpu_custom_call.1} parent=1 // pred_check
      _
    $region15: #{tpu_custom_call.1} parent=1 // pred_check_branch
      %22 = sbr.rel (0) target = $region17
    $region16: #{tpu_custom_call.1} parent=1 // pred_region
      %s24 = ssub.s32 8192, 8192
      %25 = vsyncadd [#allocation4], %s24
      %s26 = sshll.u32 [#allocation3], 4
      %s27 = int_to_ptr.vmem [resolvable:$true] %s26
      %32 = dma.hbm_to_vmem [thread:$0]  %s3, 8192, %s27, [#allocation4], 256, 256, 16
    $region17: #{tpu_custom_call.1} parent=1 // pred_fallthru
      _
    // Predicated region
    $region18: #{tpu_custom_call.1} parent=1 // pred_check
      _
    $region19: #{tpu_custom_call.1} parent=1 // pred_check_branch
      %34 = sbr.rel (0) target = $region21
    $region20: #{tpu_custom_call.1} parent=1 // pred_region
      _
    $region21: #{tpu_custom_call.1} parent=1 // pred_fallthru
      _
    // Predicated region
    $region22: #{tpu_custom_call.1} parent=1 // pred_check
      _
    $region23: #{tpu_custom_call.1} parent=1 // pred_check_branch
      %36 = sbr.rel (0) target = $region25
    $region24: #{tpu_custom_call.1} parent=1 // pred_region
      _
    $region25: #{tpu_custom_call.1} parent=1 // pred_fallthru
      _
    // Predicated region
    $region26: #{tpu_custom_call.1} parent=1 // pred_check
      _
    $region27: #{tpu_custom_call.1} parent=1 // pred_check_branch
      %38 = sbr.rel (0) target = $region29
    $region28: #{tpu_custom_call.1} parent=1 // pred_region
      _
    $region29: #{tpu_custom_call.1} parent=1 // pred_fallthru
      _
    // Predicated region
    $region30: #{tpu_custom_call.1} parent=1 // pred_check
      _
    $region31: #{tpu_custom_call.1} parent=1 // pred_check_branch
      %40 = sbr.rel (0) target = $region33
    $region32: #{tpu_custom_call.1} parent=1 // pred_region
      _
    $region33: #{tpu_custom_call.1} parent=1 // pred_fallthru
      _
    // Predicated region
    $region34: #{tpu_custom_call.1} parent=1 // pred_check
      _
    $region35: #{tpu_custom_call.1} parent=1 // pred_check_branch
      %42 = sbr.rel (0) target = $region37
    $region36: #{tpu_custom_call.1} parent=1 // pred_region
      %43 = dma.done [#allocation4], 8192
    $region37: #{tpu_custom_call.1} parent=1 // pred_fallthru
      _
    %s44 = sld [smem:[#allocation2]]
    %v45 = vld [vmem:[%s0] sm:$0xff]
    %v46 = vld [vmem:[%s1] sm:$0xff]
    %v47 = vld [vmem:[%s1 + $0x8] sm:$0xff]
    %v48 = vld [vmem:[%s1 + $0x10] sm:$0x7]
    %v49 = vld [vmem:[%s1 + $0x18] sm:$0x7]
    %v50 = vld [vmem:[%s2] sm:$0x3]
    %v52 = vlaneseq
    %v53 = vshrl.u32 %v52, 7
    %v54 = vsub.s32 0, %v53
    %v55 = vrot.slane %v50, %v54
    %v56 = vlaneseq
    %v57 = vshrl.u32 %v56, 7
    %v58 = vsub.s32 1, %v57
    %v59 = vrot.slane %v50, %v58
    %vm62 = vcmask 89088
    %v64 = vsel %vm62, %v45, 0
    %vm66 = vcmask 1042432
    %v68 = vsel %vm66, %v48, 0
    %v71 = vsel %vm66, %v49, 0
    %73 = vmatprep.subr.mxu0 %v47
    %74 = vmatpush1.msra.mxu0 %v46
    %75 = vmatprep.subr.mxu0 %v71
    %76 = vmatpush1.msra.mxu0 %v68
    %77 = vmatprep.subr.mxu0 0.0
    %78 = vmatpush1.msra.mxu0 0.0
    %79 = vmatprep.subr.mxu0 0.0
    %80 = vmatpush1.msra.mxu0 0.0
    %81 = vmatprep.subr.mxu0 0.0
    %82 = vmatpush1.msra.mxu0 0.0
    %83 = vmatprep.subr.mxu0 0.0
    %84 = vmatpush1.msra.mxu0 0.0
    %85 = vmatprep.subr.mxu0 0.0
    %86 = vmatpush1.msra.mxu0 0.0
    %87 = vmatprep.subr.mxu0 0.0
    %88 = vmatpush1.msra.mxu0 0.0
    %89 = vmatprep.subr.mxu0 0.0
    %90 = vmatpush1.msra.mxu0 0.0
    %91 = vmatprep.subr.mxu0 0.0
    %92 = vmatpush1.msra.mxu0 0.0
    %93 = vmatprep.subr.mxu0 0.0
    %94 = vmatpush1.msra.mxu0 0.0
    %95 = vmatprep.subr.mxu0 0.0
    %96 = vmatpush1.msra.mxu0 0.0
    %97 = vmatprep.subr.mxu0 0.0
    %98 = vmatpush1.msra.mxu0 0.0
    %99 = vmatprep.subr.mxu0 0.0
    %100 = vmatpush1.msra.mxu0 0.0
    %101 = vmatprep.subr.mxu0 0.0
    %102 = vmatpush1.msra.mxu0 0.0
    %103 = vmatprep.subr.mxu0 0.0
    %104 = vmatpush1.msra.mxu0 0.0
    %105 = vmatprep.subr.mxu0 0.0
    %106 = vmatpush1.msra.mxu0 0.0
    %107 = vmatprep.subr.mxu0 0.0
    %108 = vmatpush1.msra.mxu0 0.0
    %109 = vmatprep.subr.mxu0 0.0
    %110 = vmatpush1.msra.mxu0 0.0
    %111 = vmatprep.subr.mxu0 0.0
    %112 = vmatpush1.msra.mxu0 0.0
    %113 = vmatprep.subr.mxu0 0.0
    %114 = vmatpush1.msra.mxu0 0.0
    %115 = vmatprep.subr.mxu0 0.0
    %116 = vmatpush1.msra.mxu0 0.0
    %117 = vmatprep.subr.mxu0 0.0
    %118 = vmatpush1.msra.mxu0 0.0
    %119 = vmatprep.subr.mxu0 0.0
    %120 = vmatpush1.msra.mxu0 0.0
    %121 = vmatprep.subr.mxu0 0.0
    %122 = vmatpush1.msra.mxu0 0.0
    %123 = vmatprep.subr.mxu0 0.0
    %124 = vmatpush1.msra.mxu0 0.0
    %125 = vmatprep.subr.mxu0 0.0
    %126 = vmatpush1.msra.mxu0 0.0
    %127 = vmatprep.subr.mxu0 0.0
    %128 = vmatpush1.msra.mxu0 0.0
    %129 = vmatprep.subr.mxu0 0.0
    %130 = vmatpush1.msra.mxu0 0.0
    %131 = vmatprep.subr.mxu0 0.0
    %132 = vmatpush1.msra.mxu0 0.0
    %133 = vmatprep.subr.mxu0 0.0
    %134 = vmatpush1.msra.mxu0 0.0
    %135 = vmatprep.subr.mxu0 0.0
    %136 = vmatpush1.msra.mxu0 0.0
    %137 = vmatprep.mubr.f32.mxu0 0.0
    %138 = vmatmul.mubr.f32.gmra.mrb[0].mxu0 %v64
    %v139 = vpop.f32.mrb[0].mxu0
    %v140 = vadd.f32 %v55, %v139
    %v141 = vpop.f32.mrb[0].mxu0
    %v142 = vadd.f32 %v59, %v141
    %143 = vdwg.mxu0
    %v144 = vmax.f32 %v140, 0.0
    %v145 = vmax.f32 %v142, 0.0
    %v146 = vld [vmem:[#allocation3] sm:$0xff]
    %v147 = vld [vmem:[#allocation3 + $0x8] sm:$0xff]
    %v148 = vld [vmem:[#allocation3 + $0x10] sm:$0xff]
    %v149 = vld [vmem:[#allocation3 + $0x18] sm:$0xff]
    %v150 = vld [vmem:[#allocation3 + $0x20] sm:$0xff]
    %v151 = vld [vmem:[#allocation3 + $0x28] sm:$0xff]
    %v152 = vld [vmem:[#allocation3 + $0x30] sm:$0xff]
    %v153 = vld [vmem:[#allocation3 + $0x38] sm:$0xff]
    %v154 = vld [vmem:[#allocation3 + $0x40] sm:$0xff]
    %v155 = vld [vmem:[#allocation3 + $0x48] sm:$0xff]
    %v156 = vld [vmem:[#allocation3 + $0x50] sm:$0xff]
    %v157 = vld [vmem:[#allocation3 + $0x58] sm:$0xff]
    %v158 = vld [vmem:[#allocation3 + $0x60] sm:$0xff]
    %v159 = vld [vmem:[#allocation3 + $0x68] sm:$0xff]
    %v160 = vld [vmem:[#allocation3 + $0x70] sm:$0xff]
    %v161 = vld [vmem:[#allocation3 + $0x78] sm:$0xff]
    %v162 = vld [vmem:[#allocation3 + $0x80] sm:$0xff]
    %v163 = vld [vmem:[#allocation3 + $0x88] sm:$0xff]
    %v164 = vld [vmem:[#allocation3 + $0x90] sm:$0xff]
    %v165 = vld [vmem:[#allocation3 + $0x98] sm:$0xff]
    %v166 = vld [vmem:[#allocation3 + $0xa0] sm:$0xff]
    %v167 = vld [vmem:[#allocation3 + $0xa8] sm:$0xff]
    %v168 = vld [vmem:[#allocation3 + $0xb0] sm:$0xff]
    %v169 = vld [vmem:[#allocation3 + $0xb8] sm:$0xff]
    %v170 = vld [vmem:[#allocation3 + $0xc0] sm:$0xff]
    %v171 = vld [vmem:[#allocation3 + $0xc8] sm:$0xff]
    %v172 = vld [vmem:[#allocation3 + $0xd0] sm:$0xff]
    %v173 = vld [vmem:[#allocation3 + $0xd8] sm:$0xff]
    %v174 = vld [vmem:[#allocation3 + $0xe0] sm:$0xff]
    %v175 = vld [vmem:[#allocation3 + $0xe8] sm:$0xff]
    %v176 = vld [vmem:[#allocation3 + $0xf0] sm:$0xff]
    %v177 = vld [vmem:[#allocation3 + $0xf8] sm:$0xff]
    %v178 = vld [vmem:[#allocation3 + $0x100] sm:$0xff]
    %v179 = vld [vmem:[#allocation3 + $0x108] sm:$0xff]
    %v180 = vld [vmem:[#allocation3 + $0x110] sm:$0xff]
    %v181 = vld [vmem:[#allocation3 + $0x118] sm:$0xff]
    %v182 = vld [vmem:[#allocation3 + $0x120] sm:$0xff]
    %v183 = vld [vmem:[#allocation3 + $0x128] sm:$0xff]
    %v184 = vld [vmem:[#allocation3 + $0x130] sm:$0xff]
    %v185 = vld [vmem:[#allocation3 + $0x138] sm:$0xff]
    %v186 = vld [vmem:[#allocation3 + $0x140] sm:$0xff]
    %v187 = vld [vmem:[#allocation3 + $0x148] sm:$0xff]
    %v188 = vld [vmem:[#allocation3 + $0x150] sm:$0xff]
    %v189 = vld [vmem:[#allocation3 + $0x158] sm:$0xff]
    %v190 = vld [vmem:[#allocation3 + $0x160] sm:$0xff]
    %v191 = vld [vmem:[#allocation3 + $0x168] sm:$0xff]
    %v192 = vld [vmem:[#allocation3 + $0x170] sm:$0xff]
    %v193 = vld [vmem:[#allocation3 + $0x178] sm:$0xff]
    %v194 = vld [vmem:[#allocation3 + $0x180] sm:$0xff]
    %v195 = vld [vmem:[#allocation3 + $0x188] sm:$0xff]
    %v196 = vld [vmem:[#allocation3 + $0x190] sm:$0xff]
    %v197 = vld [vmem:[#allocation3 + $0x198] sm:$0xff]
    %v198 = vld [vmem:[#allocation3 + $0x1a0] sm:$0xff]
    %v199 = vld [vmem:[#allocation3 + $0x1a8] sm:$0xff]
    %v200 = vld [vmem:[#allocation3 + $0x1b0] sm:$0xff]
    %v201 = vld [vmem:[#allocation3 + $0x1b8] sm:$0xff]
    %v202 = vld [vmem:[#allocation3 + $0x1c0] sm:$0xff]
    %v203 = vld [vmem:[#allocation3 + $0x1c8] sm:$0xff]
    %v204 = vld [vmem:[#allocation3 + $0x1d0] sm:$0xff]
    %v205 = vld [vmem:[#allocation3 + $0x1d8] sm:$0xff]
    %v206 = vld [vmem:[#allocation3 + $0x1e0] sm:$0xff]
    %v207 = vld [vmem:[#allocation3 + $0x1e8] sm:$0xff]
    %v208 = vld [vmem:[#allocation3 + $0x1f0] sm:$0xff]
    %v209 = vld [vmem:[#allocation3 + $0x1f8] sm:$0xff]
    %v210 = vld [vmem:[%s4] sm:$0x3]
    %v212 = vlaneseq
    %v213 = vshrl.u32 %v212, 7
    %v214 = vsub.s32 0, %v213
    %v215 = vrot.slane %v210, %v214
    %v216 = vlaneseq
    %v217 = vshrl.u32 %v216, 7
    %v218 = vsub.s32 1, %v217
    %v219 = vrot.slane %v210, %v218
    %222 = vmatprep.subr.mxu0 %v147
    %223 = vmatpush1.msra.mxu0 %v146
    %224 = vmatprep.subr.mxu0 %v149
    %225 = vmatpush1.msra.mxu0 %v148
    %226 = vmatprep.subr.mxu0 %v151
    %227 = vmatpush1.msra.mxu0 %v150
    %228 = vmatprep.subr.mxu0 %v153
    %229 = vmatpush1.msra.mxu0 %v152
    %230 = vmatprep.subr.mxu0 %v155
    %231 = vmatpush1.msra.mxu0 %v154
    %232 = vmatprep.subr.mxu0 %v157
    %233 = vmatpush1.msra.mxu0 %v156
    %234 = vmatprep.subr.mxu0 %v159
    %235 = vmatpush1.msra.mxu0 %v158
    %236 = vmatprep.subr.mxu0 %v161
    %237 = vmatpush1.msra.mxu0 %v160
    %238 = vmatprep.subr.mxu0 %v163
    %239 = vmatpush1.msra.mxu0 %v162
    %240 = vmatprep.subr.mxu0 %v165
    %241 = vmatpush1.msra.mxu0 %v164
    %242 = vmatprep.subr.mxu0 %v167
    %243 = vmatpush1.msra.mxu0 %v166
    %244 = vmatprep.subr.mxu0 %v169
    %245 = vmatpush1.msra.mxu0 %v168
    %246 = vmatprep.subr.mxu0 %v171
    %247 = vmatpush1.msra.mxu0 %v170
    %248 = vmatprep.subr.mxu0 %v173
    %249 = vmatpush1.msra.mxu0 %v172
    %250 = vmatprep.subr.mxu0 %v175
    %251 = vmatpush1.msra.mxu0 %v174
    %252 = vmatprep.subr.mxu0 %v177
    %253 = vmatpush1.msra.mxu0 %v176
    %254 = vmatprep.subr.mxu0 %v179
    %255 = vmatpush1.msra.mxu0 %v178
    %256 = vmatprep.subr.mxu0 %v181
    %257 = vmatpush1.msra.mxu0 %v180
    %258 = vmatprep.subr.mxu0 %v183
    %259 = vmatpush1.msra.mxu0 %v182
    %260 = vmatprep.subr.mxu0 %v185
    %261 = vmatpush1.msra.mxu0 %v184
    %262 = vmatprep.subr.mxu0 %v187
    %263 = vmatpush1.msra.mxu0 %v186
    %264 = vmatprep.subr.mxu0 %v189
    %265 = vmatpush1.msra.mxu0 %v188
    %266 = vmatprep.subr.mxu0 %v191
    %267 = vmatpush1.msra.mxu0 %v190
    %268 = vmatprep.subr.mxu0 %v193
    %269 = vmatpush1.msra.mxu0 %v192
    %270 = vmatprep.subr.mxu0 %v195
    %271 = vmatpush1.msra.mxu0 %v194
    %272 = vmatprep.subr.mxu0 %v197
    %273 = vmatpush1.msra.mxu0 %v196
    %274 = vmatprep.subr.mxu0 %v199
    %275 = vmatpush1.msra.mxu0 %v198
    %276 = vmatprep.subr.mxu0 %v201
    %277 = vmatpush1.msra.mxu0 %v200
    %278 = vmatprep.subr.mxu0 %v203
    %279 = vmatpush1.msra.mxu0 %v202
    %280 = vmatprep.subr.mxu0 %v205
    %281 = vmatpush1.msra.mxu0 %v204
    %282 = vmatprep.subr.mxu0 %v207
    %283 = vmatpush1.msra.mxu0 %v206
    %284 = vmatprep.subr.mxu0 %v209
    %285 = vmatpush1.msra.mxu0 %v208
    %286 = vmatprep.mubr.f32.mxu0 %v145
    %287 = vmatmul.mubr.f32.gmra.mrb[0].mxu0 %v144
    %v288 = vpop.f32.mrb[0].mxu0
    %v289 = vadd.f32 %v215, %v288
    %v290 = vpop.f32.mrb[0].mxu0
    %v291 = vadd.f32 %v219, %v290
    %292 = vdwg.mxu0
    %v293 = vmax.f32 %v289, 0.0
    %v294 = vmax.f32 %v291, 0.0
    %v295 = vld [vmem:[%s5] sm:$0xff]
    %v296 = vld [vmem:[%s5 + $0x8] sm:$0xff]
    %v297 = vld [vmem:[%s5 + $0x10] sm:$0xff]
    %v298 = vld [vmem:[%s5 + $0x18] sm:$0xff]
    %v299 = vld [vmem:[%s5 + $0x20] sm:$0xff]
    %v300 = vld [vmem:[%s5 + $0x28] sm:$0xff]
    %v301 = vld [vmem:[%s5 + $0x30] sm:$0xff]
    %v302 = vld [vmem:[%s5 + $0x38] sm:$0xff]
    %v303 = vld [vmem:[%s5 + $0x40] sm:$0xff]
    %v304 = vld [vmem:[%s5 + $0x48] sm:$0xff]
    %v305 = vld [vmem:[%s5 + $0x50] sm:$0xff]
    %v306 = vld [vmem:[%s5 + $0x58] sm:$0xff]
    %v307 = vld [vmem:[%s5 + $0x60] sm:$0xff]
    %v308 = vld [vmem:[%s5 + $0x68] sm:$0xff]
    %v309 = vld [vmem:[%s5 + $0x70] sm:$0xff]
    %v310 = vld [vmem:[%s5 + $0x78] sm:$0xff]
    %v311 = vld [vmem:[%s5 + $0x80] sm:$0xff]
    %v312 = vld [vmem:[%s5 + $0x88] sm:$0xff]
    %v313 = vld [vmem:[%s5 + $0x90] sm:$0xff]
    %v314 = vld [vmem:[%s5 + $0x98] sm:$0xff]
    %v315 = vld [vmem:[%s5 + $0xa0] sm:$0xff]
    %v316 = vld [vmem:[%s5 + $0xa8] sm:$0xff]
    %v317 = vld [vmem:[%s5 + $0xb0] sm:$0xff]
    %v318 = vld [vmem:[%s5 + $0xb8] sm:$0xff]
    %v319 = vld [vmem:[%s5 + $0xc0] sm:$0xff]
    %v320 = vld [vmem:[%s5 + $0xc8] sm:$0xff]
    %v321 = vld [vmem:[%s5 + $0xd0] sm:$0xff]
    %v322 = vld [vmem:[%s5 + $0xd8] sm:$0xff]
    %v323 = vld [vmem:[%s5 + $0xe0] sm:$0xff]
    %v324 = vld [vmem:[%s5 + $0xe8] sm:$0xff]
    %v325 = vld [vmem:[%s5 + $0xf0] sm:$0xff]
    %v326 = vld [vmem:[%s5 + $0xf8] sm:$0xff]
    %v327 = vld [vmem:[%s6] sm:$0x1]
    %v329 = vlaneseq
    %v330 = vshrl.u32 %v329, 7
    %v331 = vsub.s32 0, %v330
    %v332 = vrot.slane %v327, %v331
    %334 = vmatprep.subr.mxu0 0.0
    %335 = vmatpush1.msra.mxu0 %v295
    %336 = vmatprep.subr.mxu0 0.0
    %337 = vmatpush1.msra.mxu0 %v296
    %338 = vmatprep.subr.mxu0 0.0
    %339 = vmatpush1.msra.mxu0 %v297
    %340 = vmatprep.subr.mxu0 0.0
    %341 = vmatpush1.msra.mxu0 %v298
    %342 = vmatprep.subr.mxu0 0.0
    %343 = vmatpush1.msra.mxu0 %v299
    %344 = vmatprep.subr.mxu0 0.0
    %345 = vmatpush1.msra.mxu0 %v300
    %346 = vmatprep.subr.mxu0 0.0
    %347 = vmatpush1.msra.mxu0 %v301
    %348 = vmatprep.subr.mxu0 0.0
    %349 = vmatpush1.msra.mxu0 %v302
    %350 = vmatprep.subr.mxu0 0.0
    %351 = vmatpush1.msra.mxu0 %v303
    %352 = vmatprep.subr.mxu0 0.0
    %353 = vmatpush1.msra.mxu0 %v304
    %354 = vmatprep.subr.mxu0 0.0
    %355 = vmatpush1.msra.mxu0 %v305
    %356 = vmatprep.subr.mxu0 0.0
    %357 = vmatpush1.msra.mxu0 %v306
    %358 = vmatprep.subr.mxu0 0.0
    %359 = vmatpush1.msra.mxu0 %v307
    %360 = vmatprep.subr.mxu0 0.0
    %361 = vmatpush1.msra.mxu0 %v308
    %362 = vmatprep.subr.mxu0 0.0
    %363 = vmatpush1.msra.mxu0 %v309
    %364 = vmatprep.subr.mxu0 0.0
    %365 = vmatpush1.msra.mxu0 %v310
    %366 = vmatprep.subr.mxu0 0.0
    %367 = vmatpush1.msra.mxu0 %v311
    %368 = vmatprep.subr.mxu0 0.0
    %369 = vmatpush1.msra.mxu0 %v312
    %370 = vmatprep.subr.mxu0 0.0
    %371 = vmatpush1.msra.mxu0 %v313
    %372 = vmatprep.subr.mxu0 0.0
    %373 = vmatpush1.msra.mxu0 %v314
    %374 = vmatprep.subr.mxu0 0.0
    %375 = vmatpush1.msra.mxu0 %v315
    %376 = vmatprep.subr.mxu0 0.0
    %377 = vmatpush1.msra.mxu0 %v316
    %378 = vmatprep.subr.mxu0 0.0
    %379 = vmatpush1.msra.mxu0 %v317
    %380 = vmatprep.subr.mxu0 0.0
    %381 = vmatpush1.msra.mxu0 %v318
    %382 = vmatprep.subr.mxu0 0.0
    %383 = vmatpush1.msra.mxu0 %v319
    %384 = vmatprep.subr.mxu0 0.0
    %385 = vmatpush1.msra.mxu0 %v320
    %386 = vmatprep.subr.mxu0 0.0
    %387 = vmatpush1.msra.mxu0 %v321
    %388 = vmatprep.subr.mxu0 0.0
    %389 = vmatpush1.msra.mxu0 %v322
    %390 = vmatprep.subr.mxu0 0.0
    %391 = vmatpush1.msra.mxu0 %v323
    %392 = vmatprep.subr.mxu0 0.0
    %393 = vmatpush1.msra.mxu0 %v324
    %394 = vmatprep.subr.mxu0 0.0
    %395 = vmatpush1.msra.mxu0 %v325
    %396 = vmatprep.subr.mxu0 0.0
    %397 = vmatpush1.msra.mxu0 %v326
    %398 = vmatprep.mubr.f32.mxu0 %v294
    %399 = vmatmul.mubr.f32.gmra.mrb[0].mxu0 %v293
    %v400 = vpop.f32.mrb[0].mxu0
    %v401 = vadd.f32 %v332, %v400
    %v402 = vpop.f32.mrb[0].mxu0
    %403 = vdwg.mxu0
    %v404 = vtanh.pop %v401
    %v405 = vstv %s44
    %v406 = vmul.f32 %v404, %v405
    %vm407 = vcmask 23552
    %408 = vst.msk [vmem:[%s8] sm:$0xff] %vm407, %v406
    // Predicated region
    $region38: #{tpu_custom_call.1} parent=1 // pred_check
      _
    $region39: #{tpu_custom_call.1} parent=1 // pred_check_branch
      %410 = sbr.rel (0) target = $region41
    $region40: #{tpu_custom_call.1} parent=1 // pred_region
      _
    $region41: #{tpu_custom_call.1} parent=1 // pred_fallthru
      _
    // Predicated region
    $region42: #{tpu_custom_call.1} parent=1 // pred_check
      _
    $region43: #{tpu_custom_call.1} parent=1 // pred_check_branch
      %412 = sbr.rel (0) target = $region45
    $region44: #{tpu_custom_call.1} parent=1 // pred_region
      _
    $region45: #{tpu_custom_call.1} parent=1 // pred_fallthru
      _
    %413 = vsyncpa [#allocation4], 1

</llo_original>
